<compile_context>
chip_gen: v7x
topology: tpu7x:2x2x1
jax: 0.10.0
libtpu: 0.0.40
codegen_flags: <defaults>
</compile_context>

<pallas_src>
import math

import jax
import jax.numpy as jnp
import numpy as np
from jax.experimental import pallas as pl
from jax.experimental.pallas import tpu as pltpu


def _gelu(v):
    # exact (erf-based) GELU, matching torch.nn.GELU default
    return 0.5 * v * (1.0 + jax.lax.erf(v * (1.0 / math.sqrt(2.0))))


def mlp_kernel(x_ref, w1_ref, b1_ref, w2_ref, b2_ref, o_ref):
    x = x_ref[...]
    h = jnp.dot(x, w1_ref[...], preferred_element_type=jnp.float32) + b1_ref[...]
    h = _gelu(h)
    y = jnp.dot(h, w2_ref[...], preferred_element_type=jnp.float32) + b2_ref[...]
    o_ref[...] = y.astype(o_ref.dtype)


def mlp_forward(x, w1, b1, w2, b2, *, block_rows=128):
    """Fused Mlp forward.

    x:  (..., C)
    w1: (C, H)   -- fc1 weight, already transposed to (in, out)
    b1: (1, H)
    w2: (H, O)   -- fc2 weight, already transposed to (in, out)
    b2: (1, O)
    returns (..., O)
    Dropout layers are identity (eval mode / drop=0.0).
    """
    orig_shape = x.shape
    C = orig_shape[-1]
    H = w1.shape[1]
    O = w2.shape[1]

    # Flatten all leading dims into one row axis so the MXU sees a tall M.
    x2 = x.reshape(-1, C)
    M = x2.shape[0]

    tm = min(block_rows, M)
    tm = max(8, (tm // 8) * 8)          # sublane-aligned row tile
    Mp = pl.cdiv(M, tm) * tm
    if Mp != M:
        x2 = jnp.pad(x2, ((0, Mp - M), (0, 0)))

    out = pl.pallas_call(
        mlp_kernel,
        out_shape=jax.ShapeDtypeStruct((Mp, O), x.dtype),
        grid_spec=pltpu.PrefetchScalarGridSpec(
            num_scalar_prefetch=0,
            grid=(Mp // tm,),
            in_specs=[
                pl.BlockSpec((tm, C), lambda i: (i, 0)),   # activations: tiled rows
                pl.BlockSpec((C, H), lambda i: (0, 0)),    # fc1 weight (whole)
                pl.BlockSpec((1, H), lambda i: (0, 0)),    # fc1 bias
                pl.BlockSpec((H, O), lambda i: (0, 0)),    # fc2 weight (whole)
                pl.BlockSpec((1, O), lambda i: (0, 0)),    # fc2 bias
            ],
            out_specs=pl.BlockSpec((tm, O), lambda i: (i, 0)),
        ),
        compiler_params=pltpu.CompilerParams(
            dimension_semantics=("parallel",),   # independent row tiles -> megacore-friendly
        ),
    )(x2, w1, b1, w2, b2)

    if Mp != M:
        out = out[:M]
    return out.reshape(*orig_shape[:-1], O)


def init_params(key, in_features, hidden_features, out_features):
    """Deterministic synthetic Mlp parameters, stored pre-transposed (in, out)."""
    k1, k2, k3, k4 = jax.random.split(key, 4)
    w1 = jax.random.normal(k1, (in_features, hidden_features), jnp.float32) * 0.1
    b1 = jax.random.normal(k2, (1, hidden_features), jnp.float32) * 0.1
    w2 = jax.random.normal(k3, (hidden_features, out_features), jnp.float32) * 0.1
    b2 = jax.random.normal(k4, (1, out_features), jnp.float32) * 0.1
    return w1, b1, w2, b2


if __name__ == "__main__":
    # Small shapes consistent with the module: tokens (B, L, C), hidden = 4*C.
    B, L, C = 2, 16, 32
    hidden = 4 * C          # 128
    out_features = C        # default out_features = in_features

    key = jax.random.PRNGKey(0)
    kx, kp = jax.random.split(key)
    x = jax.random.normal(kx, (B, L, C), jnp.float32)
    w1, b1, w2, b2 = init_params(kp, C, hidden, out_features)

    y = mlp_forward(x, w1, b1, w2, b2, block_rows=16)
    y = jax.block_until_ready(y)
    assert y.shape == (B, L, out_features)

    # Pure-JAX reference (same math, outside Pallas).
    with jax.default_matmul_precision("float32"):
        h_ref = _gelu(jnp.einsum("blc,ch->blh", x, w1) + b1)
        ref = jnp.einsum("blh,ho->blo", h_ref, w2) + b2
    np.testing.assert_allclose(np.asarray(y), np.asarray(ref), atol=1e-4, rtol=1e-4)

    # TODO(synk): training-mode Dropout (random masking) is not implemented; eval mode => identity.
    print("KERNEL_OK")
</pallas_src>

<mosaic_0001>
module attributes {stable_mosaic.version = 11 : i64} {
  func.func @mlp_kernel(%arg0: i32, %arg1: memref<16x32xf32, #tpu.memory_space<vmem>>, %arg2: memref<32x128xf32, #tpu.memory_space<vmem>>, %arg3: memref<1x128xf32, #tpu.memory_space<vmem>>, %arg4: memref<128x32xf32, #tpu.memory_space<vmem>>, %arg5: memref<1x32xf32, #tpu.memory_space<vmem>>, %arg6: memref<16x32xf32, #tpu.memory_space<vmem>>) attributes {dimension_semantics = [#tpu.dimension_semantics<parallel>], iteration_bounds = array<i64: 2>, scalar_prefetch = 0 : i64, scratch_operands = 0 : i64, tpu.core_type = #tpu.core_type<tc>, window_params = [{transform_indices = @transform_0, window_bounds = array<i64: 16, 32>}, {pipeline_mode = #tpu.pipeline_mode<synchronous>, transform_indices = @transform_1, window_bounds = array<i64: 32, 128>}, {pipeline_mode = #tpu.pipeline_mode<synchronous>, transform_indices = @transform_2, window_bounds = array<i64: 1, 128>}, {pipeline_mode = #tpu.pipeline_mode<synchronous>, transform_indices = @transform_3, window_bounds = array<i64: 128, 32>}, {pipeline_mode = #tpu.pipeline_mode<synchronous>, transform_indices = @transform_4, window_bounds = array<i64: 1, 32>}, {transform_indices = @transform_5, window_bounds = array<i64: 16, 32>}]} {
    %c0 = arith.constant 0 : index
    %c0_0 = arith.constant 0 : index
    %0 = vector.load %arg1[%c0, %c0_0] : memref<16x32xf32, #tpu.memory_space<vmem>>, vector<16x32xf32>
    %c0_1 = arith.constant 0 : index
    %c0_2 = arith.constant 0 : index
    %1 = vector.load %arg2[%c0_1, %c0_2] : memref<32x128xf32, #tpu.memory_space<vmem>>, vector<32x128xf32>
    %cst = arith.constant dense<0.000000e+00> : vector<16x128xf32>
    %2 = tpu.matmul %0, %1, %cst {dimension_numbers = #tpu.dot_dimension_numbers<[1], [0], [0], [1], [0, 0, 1, 1], [], []>} : vector<16x32xf32>, vector<32x128xf32>, vector<16x128xf32> -> vector<16x128xf32>
    %c0_3 = arith.constant 0 : index
    %c0_4 = arith.constant 0 : index
    %3 = vector.load %arg3[%c0_3, %c0_4] : memref<1x128xf32, #tpu.memory_space<vmem>>, vector<1x128xf32>
    %4 = vector.broadcast %3 : vector<1x128xf32> to vector<16x128xf32>
    %5 = arith.addf %2, %4 : vector<16x128xf32>
    %cst_5 = arith.constant 5.000000e-01 : f32
    %6 = vector.broadcast %cst_5 : f32 to vector<16x128xf32>
    %7 = arith.mulf %6, %5 : vector<16x128xf32>
    %cst_6 = arith.constant 0.707106769 : f32
    %8 = vector.broadcast %cst_6 : f32 to vector<16x128xf32>
    %9 = arith.mulf %5, %8 : vector<16x128xf32>
    %10 = math.erf %9 : vector<16x128xf32>
    %cst_7 = arith.constant 1.000000e+00 : f32
    %11 = vector.broadcast %cst_7 : f32 to vector<16x128xf32>
    %12 = arith.addf %11, %10 : vector<16x128xf32>
    %13 = arith.mulf %7, %12 : vector<16x128xf32>
    %c0_8 = arith.constant 0 : index
    %c0_9 = arith.constant 0 : index
    %14 = vector.load %arg4[%c0_8, %c0_9] : memref<128x32xf32, #tpu.memory_space<vmem>>, vector<128x32xf32>
    %cst_10 = arith.constant dense<0.000000e+00> : vector<16x32xf32>
    %15 = tpu.matmul %13, %14, %cst_10 {dimension_numbers = #tpu.dot_dimension_numbers<[1], [0], [0], [1], [0, 0, 1, 1], [], []>} : vector<16x128xf32>, vector<128x32xf32>, vector<16x32xf32> -> vector<16x32xf32>
    %c0_11 = arith.constant 0 : index
    %c0_12 = arith.constant 0 : index
    %16 = vector.load %arg5[%c0_11, %c0_12] : memref<1x32xf32, #tpu.memory_space<vmem>>, vector<1x32xf32>
    %17 = vector.broadcast %16 : vector<1x32xf32> to vector<16x32xf32>
    %18 = arith.addf %15, %17 : vector<16x32xf32>
    %c0_13 = arith.constant 0 : index
    %c0_14 = arith.constant 0 : index
    %19 = vector.load %arg6[%c0_13, %c0_14] : memref<16x32xf32, #tpu.memory_space<vmem>>, vector<16x32xf32>
    tpu.vector_store %arg6[%c0_13, %c0_14], %18 {strides = array<i32>} : memref<16x32xf32, #tpu.memory_space<vmem>>, vector<16x32xf32>,
    return
  }
  func.func @transform_0(%arg0: i32) -> (i32, i32) {
    %c0_i32 = arith.constant 0 : i32
    %c0_i32_0 = arith.constant 0 : i32
    return %arg0, %c0_i32 : i32, i32
  }
  func.func @transform_1(%arg0: i32) -> (i32, i32) {
    %c0_i32 = arith.constant 0 : i32
    %c0_i32_0 = arith.constant 0 : i32
    %c0_i32_1 = arith.constant 0 : i32
    return %c0_i32, %c0_i32_0 : i32, i32
  }
  func.func @transform_2(%arg0: i32) -> (i32, i32) {
    %c0_i32 = arith.constant 0 : i32
    %c0_i32_0 = arith.constant 0 : i32
    %c0_i32_1 = arith.constant 0 : i32
    return %c0_i32, %c0_i32_0 : i32, i32
  }
  func.func @transform_3(%arg0: i32) -> (i32, i32) {
    %c0_i32 = arith.constant 0 : i32
    %c0_i32_0 = arith.constant 0 : i32
    %c0_i32_1 = arith.constant 0 : i32
    return %c0_i32, %c0_i32_0 : i32, i32
  }
  func.func @transform_4(%arg0: i32) -> (i32, i32) {
    %c0_i32 = arith.constant 0 : i32
    %c0_i32_0 = arith.constant 0 : i32
    %c0_i32_1 = arith.constant 0 : i32
    return %c0_i32, %c0_i32_0 : i32, i32
  }
  func.func @transform_5(%arg0: i32) -> (i32, i32) {
    %c0_i32 = arith.constant 0 : i32
    %c0_i32_0 = arith.constant 0 : i32
    return %arg0, %c0_i32 : i32, i32
  }
}

</mosaic_0001>

<llo_original>
// kernel: tpu_custom_call.1
$region0: #{tpu_custom_call.1}
  #allocation0 [shape = 'u32[]', space=smem, size = 0x4, offset = 0x4, fixed_abs, tag = 'smem constant byte address 0x4 - core index']
  #allocation1 [shape = 'u32[144,128]{1,0:T(1,128)}', space=vmem, size = 0x12000, scoped, tag = 'internal scratch']
  %s0 = inlined_call_operand.vmem [shape: f32[32,32], index: 0, kind: input, shape index: {}]
  %s1 = inlined_call_operand.vmem [shape: f32[32,128], index: 1, kind: input, shape index: {}]
  %s2 = inlined_call_operand.vmem [shape: f32[1,128], index: 2, kind: input, shape index: {}]
  %s3 = inlined_call_operand.vmem [shape: f32[128,32], index: 3, kind: input, shape index: {}]
  %s4 = inlined_call_operand.vmem [shape: f32[1,32], index: 4, kind: input, shape index: {}]
  %s5 = inlined_call_operand.hbm [shape: f32[32,32], index: 5, kind: output, shape index: {}]
  %s6 = sld [smem:[#allocation0]]
  $region53: #{tpu_custom_call.1} parent=0
    _
  %s8 = ssub.s32 1, %s6
  %s9 = scalar_select 0, %s8, %s6
  $region1: #{tpu_custom_call.1} parent=0
    #allocation2 [shape = 'u8[16384]{0}', space=vmem, size = 0x4000, scoped, tag = 'output window, operand 0']
    #allocation3 [shape = 's32[2]{0}', space=sflag, size = 0x8, scoped, tag = 'scoped memory for tpu_custom_call.1']
    %10 = vsyncpa [#allocation3], 0
    %s11 = scalar_lea.sflag [#allocation3], 1
    %12 = vsyncpa %s11, 0
    loop: start=0, step=1, limit=4
    $region2: #{tpu_custom_call.1} parent=1 // loop_pre_header
      _
    $region3: #{tpu_custom_call.1} parent=1 // loop_header
      %s14 = sphi 0, %s18
      %p15 = scmp.ge.s32.totalorder %s14, 4
      %s24 = sphi 0, %s26
      %s27 = sphi 0, %s24
      %s28 = sphi 0, %s27
      %s44 = sphi 0, %s28
      %s48 = sphi 0, %s48
      %s50 = sphi 0, %s48
      %s51 = sphi 0, %s50
      %s65 = sphi 0, %s51
      %s69 = sphi 0, %s69
      %s71 = sphi 0, %s69
      %s72 = sphi 0, %s71
      %s86 = sphi 0, %s72
      %s90 = sphi 0, %s90
      %s92 = sphi 0, %s90
      %s93 = sphi 0, %s92
      %s107 = sphi 0, %s93
      %s111 = sphi 0, %s111
      %s113 = sphi 0, %s111
      %s114 = sphi 0, %s113
      %s128 = sphi 0, %s114
      %s134 = sphi 0, %s136
      %s137 = sphi 0, %s134
      %s138 = sphi 0, %s137
      %s154 = sphi 0, %s138
    $region4: #{tpu_custom_call.1} parent=1 // loop_header_branch
      %17 = sbr.rel (%p15) target = $region8
    $region5: #{tpu_custom_call.1} parent=1 // loop_body
      %s19 = ssub.s32 %s14, 1
      %s20 = ssub.s32 %s14, 2
      %s21 = sadd.s32 %s14, 1
      %s22 = ssub.s32 %s14, %s21
      %p23 = scmp.eq.s32.totalorder %s22, 0
      %s25 = sadd.s32 %s24, 1
      %s26 = scalar_select %p23, %s24, %s25
      %p29 = pneg %p23
      %p30 = scmp.eq.s32.totalorder %s14, 1
      %p31 = por %p29, %p30
      %p32 = scmp.ne.s32.totalorder %s24, %s27
      %p33 = scmp.eq.s32.totalorder %s14, 0
      %p34 = por %p32, %p33
      %p35 = scmp.ne.s32.totalorder %s24, %s27
      %p36 = scmp.eq.s32.totalorder %s19, 1
      %p37 = por %p35, %p36
      %p38 = scmp.ne.s32.totalorder %s27, %s28
      %p39 = scmp.eq.s32.totalorder %s19, 0
      %p40 = por %p38, %p39
      %p41 = scmp.ne.s32.totalorder %s27, %s28
      %p42 = scmp.eq.s32.totalorder %s20, 1
      %p43 = por %p41, %p42
      %p45 = scmp.ne.s32.totalorder %s28, %s44
      %p46 = scmp.eq.s32.totalorder %s20, 0
      %p47 = por %p45, %p46
      %s49 = sadd.s32 %s48, 1
      %p52 = scmp.eq.s32.totalorder %s14, 1
      %p53 = scmp.ne.s32.totalorder %s48, %s50
      %p54 = scmp.eq.s32.totalorder %s14, 0
      %p55 = por %p53, %p54
      %p56 = scmp.ne.s32.totalorder %s48, %s50
      %p57 = scmp.eq.s32.totalorder %s19, 1
      %p58 = por %p56, %p57
      %p59 = scmp.ne.s32.totalorder %s50, %s51
      %p60 = scmp.eq.s32.totalorder %s19, 0
      %p61 = por %p59, %p60
      %p62 = scmp.ne.s32.totalorder %s50, %s51
      %p63 = scmp.eq.s32.totalorder %s20, 1
      %p64 = por %p62, %p63
      %p66 = scmp.ne.s32.totalorder %s51, %s65
      %p67 = scmp.eq.s32.totalorder %s20, 0
      %p68 = por %p66, %p67
      %s70 = sadd.s32 %s69, 1
      %p73 = scmp.eq.s32.totalorder %s14, 1
      %p74 = scmp.ne.s32.totalorder %s69, %s71
      %p75 = scmp.eq.s32.totalorder %s14, 0
      %p76 = por %p74, %p75
      %p77 = scmp.ne.s32.totalorder %s69, %s71
      %p78 = scmp.eq.s32.totalorder %s19, 1
      %p79 = por %p77, %p78
      %p80 = scmp.ne.s32.totalorder %s71, %s72
      %p81 = scmp.eq.s32.totalorder %s19, 0
      %p82 = por %p80, %p81
      %p83 = scmp.ne.s32.totalorder %s71, %s72
      %p84 = scmp.eq.s32.totalorder %s20, 1
      %p85 = por %p83, %p84
      %p87 = scmp.ne.s32.totalorder %s72, %s86
      %p88 = scmp.eq.s32.totalorder %s20, 0
      %p89 = por %p87, %p88
      %s91 = sadd.s32 %s90, 1
      %p94 = scmp.eq.s32.totalorder %s14, 1
      %p95 = scmp.ne.s32.totalorder %s90, %s92
      %p96 = scmp.eq.s32.totalorder %s14, 0
      %p97 = por %p95, %p96
      %p98 = scmp.ne.s32.totalorder %s90, %s92
      %p99 = scmp.eq.s32.totalorder %s19, 1
      %p100 = por %p98, %p99
      %p101 = scmp.ne.s32.totalorder %s92, %s93
      %p102 = scmp.eq.s32.totalorder %s19, 0
      %p103 = por %p101, %p102
      %p104 = scmp.ne.s32.totalorder %s92, %s93
      %p105 = scmp.eq.s32.totalorder %s20, 1
      %p106 = por %p104, %p105
      %p108 = scmp.ne.s32.totalorder %s93, %s107
      %p109 = scmp.eq.s32.totalorder %s20, 0
      %p110 = por %p108, %p109
      %s112 = sadd.s32 %s111, 1
      %p115 = scmp.eq.s32.totalorder %s14, 1
      %p116 = scmp.ne.s32.totalorder %s111, %s113
      %p117 = scmp.eq.s32.totalorder %s14, 0
      %p118 = por %p116, %p117
      %p119 = scmp.ne.s32.totalorder %s111, %s113
      %p120 = scmp.eq.s32.totalorder %s19, 1
      %p121 = por %p119, %p120
      %p122 = scmp.ne.s32.totalorder %s113, %s114
      %p123 = scmp.eq.s32.totalorder %s19, 0
      %p124 = por %p122, %p123
      %p125 = scmp.ne.s32.totalorder %s113, %s114
      %p126 = scmp.eq.s32.totalorder %s20, 1
      %p127 = por %p125, %p126
      %p129 = scmp.ne.s32.totalorder %s114, %s128
      %p130 = scmp.eq.s32.totalorder %s20, 0
      %p131 = por %p129, %p130
      %s132 = ssub.s32 %s14, %s21
      %p133 = scmp.eq.s32.totalorder %s132, 0
      %s135 = sadd.s32 %s134, 1
      %s136 = scalar_select %p133, %s134, %s135
      %p139 = pneg %p133
      %p140 = scmp.eq.s32.totalorder %s14, 1
      %p141 = por %p139, %p140
      %p142 = scmp.ne.s32.totalorder %s134, %s137
      %p143 = scmp.eq.s32.totalorder %s14, 0
      %p144 = por %p142, %p143
      %p145 = scmp.ne.s32.totalorder %s134, %s137
      %p146 = scmp.eq.s32.totalorder %s19, 1
      %p147 = por %p145, %p146
      %p148 = scmp.ne.s32.totalorder %s137, %s138
      %p149 = scmp.eq.s32.totalorder %s19, 0
      %p150 = por %p148, %p149
      %p151 = scmp.ne.s32.totalorder %s137, %s138
      %p152 = scmp.eq.s32.totalorder %s20, 1
      %p153 = por %p151, %p152
      %p155 = scmp.ne.s32.totalorder %s138, %s154
      %p156 = scmp.eq.s32.totalorder %s20, 0
      %p157 = por %p155, %p156
      %p158 = scmp.le.s32.totalorder 1, %s14
      %p159 = scmp.lt.s32.totalorder %s14, 3
      %p160 = pnand %p158, %p159
      %p161 = pneg %p160
      // Predicated region
      $region9: #{tpu_custom_call.1} parent=5 // pred_check
        _
      $region10: #{tpu_custom_call.1} parent=5 // pred_check_branch
        %163 = sbr.rel (%p160) target = $region12
      $region11: #{tpu_custom_call.1} parent=5 // pred_region
        %s164 = ssub.s32 %s14, 1
        // Predicated region
        $region13: #{tpu_custom_call.1} parent=11 // pred_check
          %p165 = pneg %p61
        $region14: #{tpu_custom_call.1} parent=11 // pred_check_branch
          %167 = sbr.rel (%p165) target = $region16
        $region15: #{tpu_custom_call.1} parent=11 // pred_region
          _
        $region16: #{tpu_custom_call.1} parent=11 // pred_fallthru
          _
        // Predicated region
        $region17: #{tpu_custom_call.1} parent=11 // pred_check
          %p168 = pneg %p82
        $region18: #{tpu_custom_call.1} parent=11 // pred_check_branch
          %170 = sbr.rel (%p168) target = $region20
        $region19: #{tpu_custom_call.1} parent=11 // pred_region
          _
        $region20: #{tpu_custom_call.1} parent=11 // pred_fallthru
          _
        // Predicated region
        $region21: #{tpu_custom_call.1} parent=11 // pred_check
          %p171 = pneg %p103
        $region22: #{tpu_custom_call.1} parent=11 // pred_check_branch
          %173 = sbr.rel (%p171) target = $region24
        $region23: #{tpu_custom_call.1} parent=11 // pred_region
          _
        $region24: #{tpu_custom_call.1} parent=11 // pred_fallthru
          _
        // Predicated region
        $region25: #{tpu_custom_call.1} parent=11 // pred_check
          %p174 = pneg %p124
        $region26: #{tpu_custom_call.1} parent=11 // pred_check_branch
          %176 = sbr.rel (%p174) target = $region28
        $region27: #{tpu_custom_call.1} parent=11 // pred_region
          _
        $region28: #{tpu_custom_call.1} parent=11 // pred_fallthru
          _
      $region12: #{tpu_custom_call.1} parent=5 // pred_fallthru
        _
      %p177 = scmp.lt.s32.totalorder %s14, 2
      // Predicated region
      $region29: #{tpu_custom_call.1} parent=5 // pred_check
        %p178 = pneg %p177
      $region30: #{tpu_custom_call.1} parent=5 // pred_check_branch
        %180 = sbr.rel (%p178) target = $region32
      $region31: #{tpu_custom_call.1} parent=5 // pred_region
        // Predicated region
        $region33: #{tpu_custom_call.1} parent=31 // pred_check
          %p181 = pneg %p34
        $region34: #{tpu_custom_call.1} parent=31 // pred_check_branch
          %183 = sbr.rel (%p181) target = $region36
        $region35: #{tpu_custom_call.1} parent=31 // pred_region
          %s184 = smul.u32 2, %s14
          %p185 = scmp.lt.s32.totalorder %s184, 3
          %s186 = scalar_select %p185, %s184, 3
          %s187 = smul.addr %s186, 8
          %s188 = scalar_lea.vmem %s0, %s187
          %s189 = smul.u32 2, %s14
        $region36: #{tpu_custom_call.1} parent=31 // pred_fallthru
          _
      $region32: #{tpu_custom_call.1} parent=5 // pred_fallthru
        _
      %p190 = scmp.le.s32.totalorder 1, %s14
      %p191 = scmp.lt.s32.totalorder %s14, 3
      %p192 = pnand %p190, %p191
      %p193 = pneg %p192
      // Predicated region
      $region37: #{tpu_custom_call.1} parent=5 // pred_check
        _
      $region38: #{tpu_custom_call.1} parent=5 // pred_check_branch
        %195 = sbr.rel (%p192) target = $region40
      $region39: #{tpu_custom_call.1} parent=5 // pred_region
        %s196 = ssub.s32 %s14, 1
        %s197 = smul.u32 2, %s19
        %p198 = scmp.lt.s32.totalorder %s197, 3
        %s199 = scalar_select %p198, %s197, 3
        %s200 = smul.addr %s199, 8
        %s201 = scalar_lea.vmem %s0, %s200
        %p202 = pneg %p40
        %p203 = pneg %p37
        %p204 = pneg %p61
        %p205 = pneg %p58
        %p206 = pneg %p82
        %p207 = pneg %p79
        %p208 = pneg %p103
        %p209 = pneg %p100
        %p210 = pneg %p124
        %p211 = pneg %p121
        %p212 = pneg %p150
        %p213 = pneg %p147
        %s214 = sand.u32 %s137, 1
        %s215 = scalar_lea.sflag [#allocation3], %s214
        %s216 = sand.u32 %s137, 1
        %s217 = smul.addr %s216, 16
        %s218 = scalar_lea.vmem [#allocation2], %s217
        %s219 = smul.u32 2, %s19
        %p220 = scmp.lt.s32.totalorder %s219, 3
        %s221 = scalar_select %p220, %s219, 3
        %s222 = smul.addr %s221, 8
        %s223 = scalar_lea.vmem %s0, %s222
        %s224 = smul.u32 2, %s19
        %s225 = smul.u32 2, %s19
        %v226 = vld [vmem:[%s223] sm:$0xff]
        %v227 = vld [vmem:[%s223 + $0x8] sm:$0xff]
        %v228 = vld [vmem:[%s1] sm:$0xff]
        %v229 = vld [vmem:[%s1 + $0x8] sm:$0xff]
        %v230 = vld [vmem:[%s1 + $0x10] sm:$0xff]
        %v231 = vld [vmem:[%s1 + $0x18] sm:$0xff]
        %v232 = vld [vmem:[%s2] sm:$0x1]
        %v234 = vlaneseq
        %v235 = vshrl.u32 %v234, 7
        %v236 = vsub.s32 0, %v235
        %v237 = vrot.slane %v232, %v236
        %vm239 = vcmask 261120
        %v241 = vsel %vm239, %v226, 0
        %v244 = vsel %vm239, %v227, 0
        %246 = vmatprep.subr.mxu0 0.0
        %247 = vmatpush1.msra.mxu0 %v228
        %248 = vmatprep.subr.mxu0 0.0
        %249 = vmatpush1.msra.mxu0 %v229
        %250 = vmatprep.subr.mxu0 0.0
        %251 = vmatpush1.msra.mxu0 %v230
        %252 = vmatprep.subr.mxu0 0.0
        %253 = vmatpush1.msra.mxu0 %v231
        %254 = vmatprep.subr.mxu0 0.0
        %255 = vmatpush1.msra.mxu0 0.0
        %256 = vmatprep.subr.mxu0 0.0
        %257 = vmatpush1.msra.mxu0 0.0
        %258 = vmatprep.subr.mxu0 0.0
        %259 = vmatpush1.msra.mxu0 0.0
        %260 = vmatprep.subr.mxu0 0.0
        %261 = vmatpush1.msra.mxu0 0.0
        %262 = vmatprep.subr.mxu0 0.0
        %263 = vmatpush1.msra.mxu0 0.0
        %264 = vmatprep.subr.mxu0 0.0
        %265 = vmatpush1.msra.mxu0 0.0
        %266 = vmatprep.subr.mxu0 0.0
        %267 = vmatpush1.msra.mxu0 0.0
        %268 = vmatprep.subr.mxu0 0.0
        %269 = vmatpush1.msra.mxu0 0.0
        %270 = vmatprep.subr.mxu0 0.0
        %271 = vmatpush1.msra.mxu0 0.0
        %272 = vmatprep.subr.mxu0 0.0
        %273 = vmatpush1.msra.mxu0 0.0
        %274 = vmatprep.subr.mxu0 0.0
        %275 = vmatpush1.msra.mxu0 0.0
        %276 = vmatprep.subr.mxu0 0.0
        %277 = vmatpush1.msra.mxu0 0.0
        %278 = vmatprep.subr.mxu0 0.0
        %279 = vmatpush1.msra.mxu0 0.0
        %280 = vmatprep.subr.mxu0 0.0
        %281 = vmatpush1.msra.mxu0 0.0
        %282 = vmatprep.subr.mxu0 0.0
        %283 = vmatpush1.msra.mxu0 0.0
        %284 = vmatprep.subr.mxu0 0.0
        %285 = vmatpush1.msra.mxu0 0.0
        %286 = vmatprep.subr.mxu0 0.0
        %287 = vmatpush1.msra.mxu0 0.0
        %288 = vmatprep.subr.mxu0 0.0
        %289 = vmatpush1.msra.mxu0 0.0
        %290 = vmatprep.subr.mxu0 0.0
        %291 = vmatpush1.msra.mxu0 0.0
        %292 = vmatprep.subr.mxu0 0.0
        %293 = vmatpush1.msra.mxu0 0.0
        %294 = vmatprep.subr.mxu0 0.0
        %295 = vmatpush1.msra.mxu0 0.0
        %296 = vmatprep.subr.mxu0 0.0
        %297 = vmatpush1.msra.mxu0 0.0
        %298 = vmatprep.subr.mxu0 0.0
        %299 = vmatpush1.msra.mxu0 0.0
        %300 = vmatprep.subr.mxu0 0.0
        %301 = vmatpush1.msra.mxu0 0.0
        %302 = vmatprep.subr.mxu0 0.0
        %303 = vmatpush1.msra.mxu0 0.0
        %304 = vmatprep.subr.mxu0 0.0
        %305 = vmatpush1.msra.mxu0 0.0
        %306 = vmatprep.subr.mxu0 0.0
        %307 = vmatpush1.msra.mxu0 0.0
        %308 = vmatprep.subr.mxu0 0.0
        %309 = vmatpush1.msra.mxu0 0.0
        %310 = vmatprep.mubr.f32.mxu0 0.0
        %311 = vmatmul.mubr.f32.gmra.mrb[0].mxu0 %v241
        %v312 = vpop.f32.mrb[0].mxu0
        %v313 = vadd.f32 %v237, %v312
        %v314 = vpop.f32.mrb[0].mxu0
        %315 = vmatprep.mubr.f32.mxu0 0.0
        %316 = vmatmul.mubr.f32.gmra.mrb[0].mxu0 %v244
        %v317 = vpop.f32.mrb[0].mxu0
        %v318 = vadd.f32 %v237, %v317
        %v319 = vpop.f32.mrb[0].mxu0
        %320 = vdwg.mxu0
        %v321 = vmul.f32 %v313, 0.5
        %v322 = vmul.f32 %v318, 0.5
        %v323 = vmul.f32 %v313, 0.70710677
        %v324 = vmul.f32 %v318, 0.70710677
        %v325 = verf.f32.pop %v323
        %v326 = verf.f32.pop %v324
        %v327 = vadd.f32 %v325, 1.0
        %v328 = vadd.f32 %v326, 1.0
        %v329 = vmul.f32 %v321, %v327
        %v330 = vmul.f32 %v322, %v328
        %v331 = vld [vmem:[%s3] sm:$0xff]
        %v332 = vld [vmem:[%s3 + $0x8] sm:$0xff]
        %v333 = vld [vmem:[%s3 + $0x10] sm:$0xff]
        %v334 = vld [vmem:[%s3 + $0x18] sm:$0xff]
        %v335 = vld [vmem:[%s3 + $0x20] sm:$0xff]
        %v336 = vld [vmem:[%s3 + $0x28] sm:$0xff]
        %v337 = vld [vmem:[%s3 + $0x30] sm:$0xff]
        %v338 = vld [vmem:[%s3 + $0x38] sm:$0xff]
        %v339 = vld [vmem:[%s3 + $0x40] sm:$0xff]
        %v340 = vld [vmem:[%s3 + $0x48] sm:$0xff]
        %v341 = vld [vmem:[%s3 + $0x50] sm:$0xff]
        %v342 = vld [vmem:[%s3 + $0x58] sm:$0xff]
        %v343 = vld [vmem:[%s3 + $0x60] sm:$0xff]
        %v344 = vld [vmem:[%s3 + $0x68] sm:$0xff]
        %v345 = vld [vmem:[%s3 + $0x70] sm:$0xff]
        %v346 = vld [vmem:[%s3 + $0x78] sm:$0xff]
        %v347 = vld [vmem:[%s4] sm:$0x1]
        %v349 = vlaneseq
        %v350 = vshrl.u32 %v349, 7
        %v351 = vsub.s32 0, %v350
        %v352 = vrot.slane %v347, %v351
        %354 = vmatprep.subr.mxu0 0.0
        %355 = vmatpush1.msra.mxu0 %v331
        %356 = vmatprep.subr.mxu0 0.0
        %357 = vmatpush1.msra.mxu0 %v332
        %358 = vmatprep.subr.mxu0 0.0
        %359 = vmatpush1.msra.mxu0 %v333
        %360 = vmatprep.subr.mxu0 0.0
        %361 = vmatpush1.msra.mxu0 %v334
        %362 = vmatprep.subr.mxu0 0.0
        %363 = vmatpush1.msra.mxu0 %v335
        %364 = vmatprep.subr.mxu0 0.0
        %365 = vmatpush1.msra.mxu0 %v336
        %366 = vmatprep.subr.mxu0 0.0
        %367 = vmatpush1.msra.mxu0 %v337
        %368 = vmatprep.subr.mxu0 0.0
        %369 = vmatpush1.msra.mxu0 %v338
        %370 = vmatprep.subr.mxu0 0.0
        %371 = vmatpush1.msra.mxu0 %v339
        %372 = vmatprep.subr.mxu0 0.0
        %373 = vmatpush1.msra.mxu0 %v340
        %374 = vmatprep.subr.mxu0 0.0
        %375 = vmatpush1.msra.mxu0 %v341
        %376 = vmatprep.subr.mxu0 0.0
        %377 = vmatpush1.msra.mxu0 %v342
        %378 = vmatprep.subr.mxu0 0.0
        %379 = vmatpush1.msra.mxu0 %v343
        %380 = vmatprep.subr.mxu0 0.0
        %381 = vmatpush1.msra.mxu0 %v344
        %382 = vmatprep.subr.mxu0 0.0
        %383 = vmatpush1.msra.mxu0 %v345
        %384 = vmatprep.subr.mxu0 0.0
        %385 = vmatpush1.msra.mxu0 %v346
        %386 = vmatprep.subr.mxu0 0.0
        %387 = vmatpush1.msra.mxu0 0.0
        %388 = vmatprep.subr.mxu0 0.0
        %389 = vmatpush1.msra.mxu0 0.0
        %390 = vmatprep.subr.mxu0 0.0
        %391 = vmatpush1.msra.mxu0 0.0
        %392 = vmatprep.subr.mxu0 0.0
        %393 = vmatpush1.msra.mxu0 0.0
        %394 = vmatprep.subr.mxu0 0.0
        %395 = vmatpush1.msra.mxu0 0.0
        %396 = vmatprep.subr.mxu0 0.0
        %397 = vmatpush1.msra.mxu0 0.0
        %398 = vmatprep.subr.mxu0 0.0
        %399 = vmatpush1.msra.mxu0 0.0
        %400 = vmatprep.subr.mxu0 0.0
        %401 = vmatpush1.msra.mxu0 0.0
        %402 = vmatprep.subr.mxu0 0.0
        %403 = vmatpush1.msra.mxu0 0.0
        %404 = vmatprep.subr.mxu0 0.0
        %405 = vmatpush1.msra.mxu0 0.0
        %406 = vmatprep.subr.mxu0 0.0
        %407 = vmatpush1.msra.mxu0 0.0
        %408 = vmatprep.subr.mxu0 0.0
        %409 = vmatpush1.msra.mxu0 0.0
        %410 = vmatprep.subr.mxu0 0.0
        %411 = vmatpush1.msra.mxu0 0.0
        %412 = vmatprep.subr.mxu0 0.0
        %413 = vmatpush1.msra.mxu0 0.0
        %414 = vmatprep.subr.mxu0 0.0
        %415 = vmatpush1.msra.mxu0 0.0
        %416 = vmatprep.subr.mxu0 0.0
        %417 = vmatpush1.msra.mxu0 0.0
        %418 = vmatprep.mubr.f32.mxu0 0.0
        %419 = vmatmul.mubr.f32.gmra.mrb[0].mxu0 %v329
        %v420 = vpop.f32.mrb[0].mxu0
        %v421 = vadd.f32 %v352, %v420
        %v422 = vpop.f32.mrb[0].mxu0
        %423 = vmatprep.mubr.f32.mxu0 0.0
        %424 = vmatmul.mubr.f32.gmra.mrb[0].mxu0 %v330
        %v425 = vpop.f32.mrb[0].mxu0
        %v426 = vadd.f32 %v352, %v425
        %v427 = vpop.f32.mrb[0].mxu0
        %428 = vdwg.mxu0
        %429 = vst.msk [vmem:[%s218] sm:$0xff] %vm239, %v421
        %430 = vst.msk [vmem:[%s218 + $0x8] sm:$0xff] %vm239, %v426
        %s431 = sand.u32 %s137, 1
        %s432 = scalar_lea.sflag [#allocation3], %s431
        %s433 = sand.u32 %s137, 1
        %s434 = smul.addr %s433, 16
        %s435 = scalar_lea.vmem [#allocation2], %s434
        // Predicated region
        $region41: #{tpu_custom_call.1} parent=39 // pred_check
          %p436 = pneg %p147
        $region42: #{tpu_custom_call.1} parent=39 // pred_check_branch
          %438 = sbr.rel (%p436) target = $region44
        $region43: #{tpu_custom_call.1} parent=39 // pred_region
          %s439 = smul.u32 2, %s19
          %s441 = ssub.s32 256, 256
          %442 = vsyncadd %s432, %s441
          %s443 = smul.addr %s439, 128
          %s444 = scalar_lea.hbm %s5, %s443
          %s445 = sshll.u32 %s435, 4
          %s446 = int_to_ptr.vmem [resolvable:$true] %s445
          %451 = dma.vmem_to_hbm [thread:$0]  %s446, 256, %s444, %s432, 128, 128, 8
        $region44: #{tpu_custom_call.1} parent=39 // pred_fallthru
          _
      $region40: #{tpu_custom_call.1} parent=5 // pred_fallthru
        _
      %p452 = scmp.le.s32.totalorder 2, %s14
      // Predicated region
      $region45: #{tpu_custom_call.1} parent=5 // pred_check
        %p453 = pneg %p452
      $region46: #{tpu_custom_call.1} parent=5 // pred_check_branch
        %455 = sbr.rel (%p453) target = $region48
      $region47: #{tpu_custom_call.1} parent=5 // pred_region
        %s456 = ssub.s32 %s14, 2
        // Predicated region
        $region49: #{tpu_custom_call.1} parent=47 // pred_check
          %p457 = pneg %p153
        $region50: #{tpu_custom_call.1} parent=47 // pred_check_branch
          %459 = sbr.rel (%p457) target = $region52
        $region51: #{tpu_custom_call.1} parent=47 // pred_region
          %s460 = sand.u32 %s138, 1
          %s461 = scalar_lea.sflag [#allocation3], %s460
          %s462 = sand.u32 %s138, 1
          %s463 = smul.addr %s462, 16
          %s464 = scalar_lea.vmem [#allocation2], %s463
          %465 = dma.done %s461, 256
        $region52: #{tpu_custom_call.1} parent=47 // pred_fallthru
          _
      $region48: #{tpu_custom_call.1} parent=5 // pred_fallthru
        _
    $region6: #{tpu_custom_call.1} parent=1 // loop_footer
      %s18 = sadd.s32 1, %s14
    $region7: #{tpu_custom_call.1} parent=1 // loop_footer_branch
      %13 = sbr.rel target = $region3
    $region8: #{tpu_custom_call.1} parent=1 // loop_exit
      _
    %466 = vsyncpa [#allocation3], 1
    %s467 = scalar_lea.sflag [#allocation3], 1
    %468 = vsyncpa %s467, 1

</llo_original>
